<compile_context>
chip_gen: v7x
topology: tpu7x:2x2x1
jax: 0.10.0
libtpu: 0.0.40
codegen_flags: <defaults>
</compile_context>

<pallas_src>
import math

import jax
import jax.numpy as jnp
from jax import lax
from jax.experimental import pallas as pl
from jax.experimental.pallas import tpu as pltpu


def _mha_kernel(heads, key_dim):
    inv_sqrt_kd = 1.0 / math.sqrt(key_dim)

    def kernel(xf_ref, xq_ref, wq_ref, wk_ref, wv_ref, wo_ref, o_ref, acc_ref):
        h = pl.program_id(2)
        cdt = xq_ref.dtype  # compute dtype fed to the MXU (f32 or bf16)

        @pl.when(h == 0)
        def _init():
            acc_ref[...] = jnp.zeros_like(acc_ref)

        xq = xq_ref[0]   # (tq, D)  query-tile slab
        xf = xf_ref[0]   # (S,  D)  full sequence (for K/V)
        wq = wq_ref[0]   # (D, kd)  pre-transposed, head h
        wk = wk_ref[0]   # (D, kd)
        wv = wv_ref[0]   # (D, kd)
        wo = wo_ref[0]   # (kd, D)  pre-transposed slice of the output projection

        # Projections for this head — weights already in (in, out) layout: no .T.
        q = jnp.dot(xq, wq, preferred_element_type=jnp.float32)   # (tq, kd)
        k = jnp.dot(xf, wk, preferred_element_type=jnp.float32)   # (S,  kd)
        v = jnp.dot(xf, wv, preferred_element_type=jnp.float32)   # (S,  kd)

        # Scores: contract kd of q against kd of k directly (no materialized transpose).
        score = lax.dot_general(
            q.astype(cdt), k.astype(cdt), (((1,), (1,)), ((), ())),
            preferred_element_type=jnp.float32) * inv_sqrt_kd      # (tq, S)

        m = jnp.max(score, axis=-1, keepdims=True)
        p = jnp.exp(score - m)
        denom = jnp.sum(p, axis=-1, keepdims=True)
        p = p * pl.reciprocal(denom, approx=True)                  # softmax, (tq, S)

        attn = jnp.dot(p.astype(cdt), v.astype(cdt),
                       preferred_element_type=jnp.float32)         # (tq, kd)

        # Fused output projection: accumulate this head's contribution.
        acc_ref[...] += jnp.dot(attn.astype(cdt), wo,
                                preferred_element_type=jnp.float32)  # (tq, D)

        @pl.when(h == heads - 1)
        def _store():
            o_ref[0] = acc_ref[...].astype(o_ref.dtype)

    return kernel


def _pick_q_tile(seq_len):
    for t in (256, 128):
        if seq_len % t == 0:
            return t
    return seq_len


def _vmem_limit_bytes():
    try:
        cap = int(pltpu.get_tpu_info().vmem_capacity_bytes)
    except Exception:
        cap = 64 * 1024 * 1024  # conservative default (v7x per-core VMEM)
    return min(int(cap * 0.85), 100 * 1024 * 1024)


def multi_head_attention(x, wq, wk, wv, wo, *, heads, compute_dtype=None, q_tile=None):
    """x: (B, S, D); w*: (D, D) in PyTorch nn.Linear (out, in) convention, bias=False."""
    B, S, D = x.shape
    assert D % heads == 0, "dmodel must be divisible by heads"
    kd = D // heads
    cdt = compute_dtype or x.dtype

    tq = q_tile or _pick_q_tile(S)
    assert S % tq == 0
    n_q = S // tq

    # Pre-transpose + head-split the weights ONCE outside the kernel.
    #   wq_h[h, i, j] = wq[h*kd + j, i]  -> per-head (D, kd) "x @ W" layout
    #   wo_h[h, j, e] = wo[e, h*kd + j]  -> per-head (kd, D) output-projection slice
    wq_h = jnp.reshape(wq, (heads, kd, D)).transpose(0, 2, 1).astype(cdt)
    wk_h = jnp.reshape(wk, (heads, kd, D)).transpose(0, 2, 1).astype(cdt)
    wv_h = jnp.reshape(wv, (heads, kd, D)).transpose(0, 2, 1).astype(cdt)
    wo_h = jnp.reshape(wo, (D, heads, kd)).transpose(1, 2, 0).astype(cdt)

    xc = x.astype(cdt)

    grid = (B, n_q, heads)

    return pl.pallas_call(
        _mha_kernel(heads, kd),
        out_shape=jax.ShapeDtypeStruct((B, S, D), x.dtype),
        grid_spec=pltpu.PrefetchScalarGridSpec(
            num_scalar_prefetch=0,
            grid=grid,
            in_specs=[
                pl.BlockSpec((1, S, D), lambda b, qi, h: (b, 0, 0)),    # x (full, for K/V)
                pl.BlockSpec((1, tq, D), lambda b, qi, h: (b, qi, 0)),  # x (query tile)
                pl.BlockSpec((1, D, kd), lambda b, qi, h: (h, 0, 0)),   # Wq head slice
                pl.BlockSpec((1, D, kd), lambda b, qi, h: (h, 0, 0)),   # Wk head slice
                pl.BlockSpec((1, D, kd), lambda b, qi, h: (h, 0, 0)),   # Wv head slice
                pl.BlockSpec((1, kd, D), lambda b, qi, h: (h, 0, 0)),   # Wo head slice
            ],
            out_specs=pl.BlockSpec((1, tq, D), lambda b, qi, h: (b, qi, 0)),
            scratch_shapes=[pltpu.VMEM((tq, D), jnp.float32)],
        ),
        compiler_params=pltpu.CompilerParams(
            dimension_semantics=("parallel", "parallel", "arbitrary"),
            vmem_limit_bytes=_vmem_limit_bytes(),
        ),
    )(xc, xc, wq_h, wk_h, wv_h, wo_h)


def _reference(x, wq, wk, wv, wo, *, heads):
    """Pure-JAX reference mirroring the PyTorch forward exactly."""
    B, S, D = x.shape
    kd = D // heads
    q = x @ wq.T
    k = x @ wk.T
    v = x @ wv.T
    q = q.reshape(B, S, heads, kd).transpose(0, 2, 1, 3)
    k = k.reshape(B, S, heads, kd).transpose(0, 2, 1, 3)
    v = v.reshape(B, S, heads, kd).transpose(0, 2, 1, 3)
    score = jnp.einsum("bhqd,bhkd->bhqk", q, k) / jnp.sqrt(jnp.float32(kd))
    soft = jax.nn.softmax(score, axis=-1)
    out = jnp.einsum("bhqk,bhkd->bhqd", soft, v)
    out = out.transpose(0, 2, 1, 3).reshape(B, S, D)
    return out @ wo.T


if __name__ == "__main__":
    B, S, D, H = 2, 8, 32, 4

    key = jax.random.PRNGKey(0)
    kx, k0, k1, k2, k3 = jax.random.split(key, 5)

    x = jax.random.normal(kx, (B, S, D), dtype=jnp.float32)
    bound = 1.0 / math.sqrt(D)
    wq = jax.random.uniform(k0, (D, D), jnp.float32, -bound, bound)
    wk = jax.random.uniform(k1, (D, D), jnp.float32, -bound, bound)
    wv = jax.random.uniform(k2, (D, D), jnp.float32, -bound, bound)
    wo = jax.random.uniform(k3, (D, D), jnp.float32, -bound, bound)

    ref = _reference(x, wq, wk, wv, wo, heads=H)

    # f32 MXU-input path (exact apart from the approx softmax reciprocal).
    out_f32 = jax.block_until_ready(multi_head_attention(x, wq, wk, wv, wo, heads=H))
    assert out_f32.shape == (B, S, D)
    err_f32 = jnp.max(jnp.abs(out_f32 - ref))
    assert jnp.allclose(out_f32, ref, atol=5e-3, rtol=5e-3), f"f32 max abs err {err_f32}"

    # bf16 MXU-input / f32-accumulate path (fast path for v6e/v7x).
    out_bf16 = jax.block_until_ready(
        multi_head_attention(x, wq, wk, wv, wo, heads=H, compute_dtype=jnp.bfloat16))
    err_bf16 = jnp.max(jnp.abs(out_bf16 - ref))
    assert jnp.allclose(out_bf16, ref, atol=5e-2, rtol=5e-2), f"bf16 max abs err {err_bf16}"

    print("KERNEL_OK")
</pallas_src>

<mosaic_0001>
module attributes {stable_mosaic.version = 11 : i64} {
  func.func @kernel(%arg0: i32, %arg1: i32, %arg2: i32, %arg3: memref<1x8x32xf32, #tpu.memory_space<vmem>>, %arg4: memref<1x8x32xf32, #tpu.memory_space<vmem>>, %arg5: memref<1x32x8xf32, #tpu.memory_space<vmem>>, %arg6: memref<1x32x8xf32, #tpu.memory_space<vmem>>, %arg7: memref<1x32x8xf32, #tpu.memory_space<vmem>>, %arg8: memref<1x8x32xf32, #tpu.memory_space<vmem>>, %arg9: memref<1x8x32xf32, #tpu.memory_space<vmem>>, %arg10: memref<8x32xf32, #tpu.memory_space<vmem>>) attributes {dimension_semantics = [#tpu.dimension_semantics<parallel>, #tpu.dimension_semantics<parallel>, #tpu.dimension_semantics<arbitrary>], iteration_bounds = array<i64: 2, 1, 4>, scalar_prefetch = 0 : i64, scratch_operands = 1 : i64, tpu.core_type = #tpu.core_type<tc>, window_params = [{transform_indices = @transform_0, window_bounds = array<i64: 1, 8, 32>}, {transform_indices = @transform_1, window_bounds = array<i64: 1, 8, 32>}, {transform_indices = @transform_2, window_bounds = array<i64: 1, 32, 8>}, {transform_indices = @transform_3, window_bounds = array<i64: 1, 32, 8>}, {transform_indices = @transform_4, window_bounds = array<i64: 1, 32, 8>}, {transform_indices = @transform_5, window_bounds = array<i64: 1, 8, 32>}, {transform_indices = @transform_6, window_bounds = array<i64: 1, 8, 32>}]} {
    %c0_i32 = arith.constant 0 : i32
    %0 = arith.cmpi eq, %arg2, %c0_i32 : i32
    %1 = arith.extui %0 : i1 to i32
    %c0_i32_0 = arith.constant 0 : i32
    %2 = arith.cmpi ne, %1, %c0_i32_0 : i32
    scf.if %2 {
      %cst_31 = arith.constant 0.000000e+00 : f32
      %39 = vector.broadcast %cst_31 : f32 to vector<8x32xf32>
      %c0_32 = arith.constant 0 : index
      %c0_33 = arith.constant 0 : index
      %40 = vector.load %arg10[%c0_32, %c0_33] : memref<8x32xf32, #tpu.memory_space<vmem>>, vector<8x32xf32>
      tpu.vector_store %arg10[%c0_32, %c0_33], %39 {strides = array<i32>} : memref<8x32xf32, #tpu.memory_space<vmem>>, vector<8x32xf32>,
    } else {
    }
    %c0 = arith.constant 0 : index
    %c0_1 = arith.constant 0 : index
    %c0_2 = arith.constant 0 : index
    %3 = vector.load %arg4[%c0, %c0_1, %c0_2] : memref<1x8x32xf32, #tpu.memory_space<vmem>>, vector<1x8x32xf32>
    %4 = vector.shape_cast %3 : vector<1x8x32xf32> to vector<8x32xf32>
    %c0_3 = arith.constant 0 : index
    %c0_4 = arith.constant 0 : index
    %c0_5 = arith.constant 0 : index
    %5 = vector.load %arg3[%c0_3, %c0_4, %c0_5] : memref<1x8x32xf32, #tpu.memory_space<vmem>>, vector<1x8x32xf32>
    %6 = vector.shape_cast %5 : vector<1x8x32xf32> to vector<8x32xf32>
    %c0_6 = arith.constant 0 : index
    %c0_7 = arith.constant 0 : index
    %c0_8 = arith.constant 0 : index
    %7 = vector.load %arg5[%c0_6, %c0_7, %c0_8] : memref<1x32x8xf32, #tpu.memory_space<vmem>>, vector<1x32x8xf32>
    %8 = vector.shape_cast %7 : vector<1x32x8xf32> to vector<32x8xf32>
    %c0_9 = arith.constant 0 : index
    %c0_10 = arith.constant 0 : index
    %c0_11 = arith.constant 0 : index
    %9 = vector.load %arg6[%c0_9, %c0_10, %c0_11] : memref<1x32x8xf32, #tpu.memory_space<vmem>>, vector<1x32x8xf32>
    %10 = vector.shape_cast %9 : vector<1x32x8xf32> to vector<32x8xf32>
    %c0_12 = arith.constant 0 : index
    %c0_13 = arith.constant 0 : index
    %c0_14 = arith.constant 0 : index
    %11 = vector.load %arg7[%c0_12, %c0_13, %c0_14] : memref<1x32x8xf32, #tpu.memory_space<vmem>>, vector<1x32x8xf32>
    %12 = vector.shape_cast %11 : vector<1x32x8xf32> to vector<32x8xf32>
    %c0_15 = arith.constant 0 : index
    %c0_16 = arith.constant 0 : index
    %c0_17 = arith.constant 0 : index
    %13 = vector.load %arg8[%c0_15, %c0_16, %c0_17] : memref<1x8x32xf32, #tpu.memory_space<vmem>>, vector<1x8x32xf32>
    %14 = vector.shape_cast %13 : vector<1x8x32xf32> to vector<8x32xf32>
    %cst = arith.constant dense<0.000000e+00> : vector<8x8xf32>
    %15 = tpu.matmul %4, %8, %cst {dimension_numbers = #tpu.dot_dimension_numbers<[1], [0], [0], [1], [0, 0, 1, 1], [], []>} : vector<8x32xf32>, vector<32x8xf32>, vector<8x8xf32> -> vector<8x8xf32>
    %cst_18 = arith.constant dense<0.000000e+00> : vector<8x8xf32>
    %16 = tpu.matmul %6, %10, %cst_18 {dimension_numbers = #tpu.dot_dimension_numbers<[1], [0], [0], [1], [0, 0, 1, 1], [], []>} : vector<8x32xf32>, vector<32x8xf32>, vector<8x8xf32> -> vector<8x8xf32>
    %cst_19 = arith.constant dense<0.000000e+00> : vector<8x8xf32>
    %17 = tpu.matmul %6, %12, %cst_19 {dimension_numbers = #tpu.dot_dimension_numbers<[1], [0], [0], [1], [0, 0, 1, 1], [], []>} : vector<8x32xf32>, vector<32x8xf32>, vector<8x8xf32> -> vector<8x8xf32>
    %cst_20 = arith.constant dense<0.000000e+00> : vector<8x8xf32>
    %18 = tpu.matmul %15, %16, %cst_20 {dimension_numbers = #tpu.dot_dimension_numbers<[1], [1], [0], [0], [0, 0, 1, 0], [], []>} : vector<8x8xf32>, vector<8x8xf32>, vector<8x8xf32> -> vector<8x8xf32>
    %cst_21 = arith.constant 0.353553385 : f32
    %19 = vector.broadcast %cst_21 : f32 to vector<8x8xf32>
    %20 = arith.mulf %18, %19 : vector<8x8xf32>
    %cst_22 = arith.constant dense<0xFF800000> : vector<8xf32>
    %21 = vector.multi_reduction <maximumf>, %20, %cst_22 [1] : vector<8x8xf32> to vector<8xf32>
    %22 = vector.shape_cast %21 : vector<8xf32> to vector<8x1xf32>
    %23 = vector.broadcast %22 : vector<8x1xf32> to vector<8x8xf32>
    %24 = arith.subf %20, %23 : vector<8x8xf32>
    %25 = math.exp %24 : vector<8x8xf32>
    %cst_23 = arith.constant dense<0.000000e+00> : vector<8xf32>
    %26 = vector.multi_reduction <add>, %25, %cst_23 [1] : vector<8x8xf32> to vector<8xf32>
    %27 = vector.shape_cast %26 : vector<8xf32> to vector<8x1xf32>
    %28 = tpu.reciprocal %27 {approx = true} : vector<8x1xf32> -> vector<8x1xf32>
    %29 = vector.broadcast %28 : vector<8x1xf32> to vector<8x8xf32>
    %30 = arith.mulf %25, %29 : vector<8x8xf32>
    %cst_24 = arith.constant dense<0.000000e+00> : vector<8x8xf32>
    %31 = tpu.matmul %30, %17, %cst_24 {dimension_numbers = #tpu.dot_dimension_numbers<[1], [0], [0], [1], [0, 0, 1, 1], [], []>} : vector<8x8xf32>, vector<8x8xf32>, vector<8x8xf32> -> vector<8x8xf32>
    %c0_25 = arith.constant 0 : index
    %c0_26 = arith.constant 0 : index
    %32 = vector.load %arg10[%c0_25, %c0_26] : memref<8x32xf32, #tpu.memory_space<vmem>>, vector<8x32xf32>
    %cst_27 = arith.constant dense<0.000000e+00> : vector<8x32xf32>
    %33 = tpu.matmul %31, %14, %cst_27 {dimension_numbers = #tpu.dot_dimension_numbers<[1], [0], [0], [1], [0, 0, 1, 1], [], []>} : vector<8x8xf32>, vector<8x32xf32>, vector<8x32xf32> -> vector<8x32xf32>
    %34 = arith.addf %32, %33 : vector<8x32xf32>
    %c0_28 = arith.constant 0 : index
    %c0_29 = arith.constant 0 : index
    %35 = vector.load %arg10[%c0_28, %c0_29] : memref<8x32xf32, #tpu.memory_space<vmem>>, vector<8x32xf32>
    tpu.vector_store %arg10[%c0_28, %c0_29], %34 {strides = array<i32>} : memref<8x32xf32, #tpu.memory_space<vmem>>, vector<8x32xf32>,
    %c3_i32 = arith.constant 3 : i32
    %36 = arith.cmpi eq, %arg2, %c3_i32 : i32
    %37 = arith.extui %36 : i1 to i32
    %c0_i32_30 = arith.constant 0 : i32
    %38 = arith.cmpi ne, %37, %c0_i32_30 : i32
    scf.if %38 {
      %c0_31 = arith.constant 0 : index
      %c0_32 = arith.constant 0 : index
      %39 = vector.load %arg10[%c0_31, %c0_32] : memref<8x32xf32, #tpu.memory_space<vmem>>, vector<8x32xf32>
      %c0_33 = arith.constant 0 : index
      %c0_34 = arith.constant 0 : index
      %c0_35 = arith.constant 0 : index
      %40 = vector.load %arg9[%c0_33, %c0_34, %c0_35] : memref<1x8x32xf32, #tpu.memory_space<vmem>>, vector<1x8x32xf32>
      %41 = vector.shape_cast %40 : vector<1x8x32xf32> to vector<8x32xf32>
      %42 = vector.shape_cast %39 : vector<8x32xf32> to vector<1x8x32xf32>
      tpu.vector_store %arg9[%c0_33, %c0_34, %c0_35], %42 {strides = array<i32>} : memref<1x8x32xf32, #tpu.memory_space<vmem>>, vector<1x8x32xf32>,
    } else {
    }
    return
  }
  func.func @transform_0(%arg0: i32, %arg1: i32, %arg2: i32) -> (i32, i32, i32) {
    %c0_i32 = arith.constant 0 : i32
    %c0_i32_0 = arith.constant 0 : i32
    %c0_i32_1 = arith.constant 0 : i32
    return %arg0, %c0_i32, %c0_i32_0 : i32, i32, i32
  }
  func.func @transform_1(%arg0: i32, %arg1: i32, %arg2: i32) -> (i32, i32, i32) {
    %c0_i32 = arith.constant 0 : i32
    %c0_i32_0 = arith.constant 0 : i32
    return %arg0, %arg1, %c0_i32 : i32, i32, i32
  }
  func.func @transform_2(%arg0: i32, %arg1: i32, %arg2: i32) -> (i32, i32, i32) {
    %c0_i32 = arith.constant 0 : i32
    %c0_i32_0 = arith.constant 0 : i32
    %c0_i32_1 = arith.constant 0 : i32
    return %arg2, %c0_i32, %c0_i32_0 : i32, i32, i32
  }
  func.func @transform_3(%arg0: i32, %arg1: i32, %arg2: i32) -> (i32, i32, i32) {
    %c0_i32 = arith.constant 0 : i32
    %c0_i32_0 = arith.constant 0 : i32
    %c0_i32_1 = arith.constant 0 : i32
    return %arg2, %c0_i32, %c0_i32_0 : i32, i32, i32
  }
  func.func @transform_4(%arg0: i32, %arg1: i32, %arg2: i32) -> (i32, i32, i32) {
    %c0_i32 = arith.constant 0 : i32
    %c0_i32_0 = arith.constant 0 : i32
    %c0_i32_1 = arith.constant 0 : i32
    return %arg2, %c0_i32, %c0_i32_0 : i32, i32, i32
  }
  func.func @transform_5(%arg0: i32, %arg1: i32, %arg2: i32) -> (i32, i32, i32) {
    %c0_i32 = arith.constant 0 : i32
    %c0_i32_0 = arith.constant 0 : i32
    %c0_i32_1 = arith.constant 0 : i32
    return %arg2, %c0_i32, %c0_i32_0 : i32, i32, i32
  }
  func.func @transform_6(%arg0: i32, %arg1: i32, %arg2: i32) -> (i32, i32, i32) {
    %c0_i32 = arith.constant 0 : i32
    %c0_i32_0 = arith.constant 0 : i32
    return %arg0, %arg1, %c0_i32 : i32, i32, i32
  }
}

</mosaic_0001>

<llo_original>
// kernel: tpu_custom_call.1
$region0: #{tpu_custom_call.1}
  #allocation0 [shape = 'u32[]', space=smem, size = 0x4, offset = 0x4, fixed_abs, tag = 'smem constant byte address 0x4 - core index']
  #allocation1 [shape = 'u32[144,128]{1,0:T(1,128)}', space=vmem, size = 0x12000, scoped, tag = 'internal scratch']
  #allocation2 [shape = 'f32[8,32]{1,0:T(8,128)}', space=vmem, size = 0x1000, scoped, tag = 'scratch operand']
  %s0 = inlined_call_operand.vmem [shape: f32[2,8,32], index: 0, kind: input, shape index: {}]
  %s1 = inlined_call_operand.vmem [shape: f32[2,8,32], index: 1, kind: input, shape index: {}]
  %s2 = inlined_call_operand.vmem [shape: f32[4,32,8], index: 2, kind: input, shape index: {}]
  %s3 = inlined_call_operand.vmem [shape: f32[4,32,8], index: 3, kind: input, shape index: {}]
  %s4 = inlined_call_operand.vmem [shape: f32[4,32,8], index: 4, kind: input, shape index: {}]
  %s5 = inlined_call_operand.vmem [shape: f32[4,8,32], index: 5, kind: input, shape index: {}]
  %s6 = inlined_call_operand.hbm [shape: f32[2,8,32], index: 6, kind: output, shape index: {}]
  %s7 = sld [smem:[#allocation0]]
  $region65: #{tpu_custom_call.1} parent=0
    _
  %s9 = ssub.s32 1, %s7
  %s10 = scalar_select 0, %s9, %s7
  $region1: #{tpu_custom_call.1} parent=0
    #allocation3 [shape = 'u8[8192]{0}', space=vmem, size = 0x2000, scoped, tag = 'output window, operand 0']
    #allocation4 [shape = 's32[2]{0}', space=sflag, size = 0x8, scoped, tag = 'scoped memory for tpu_custom_call.1']
    %11 = vsyncpa [#allocation4], 0
    %s12 = scalar_lea.sflag [#allocation4], 1
    %13 = vsyncpa %s12, 0
    loop: start=0, step=1, limit=10
    $region2: #{tpu_custom_call.1} parent=1 // loop_pre_header
      _
    $region3: #{tpu_custom_call.1} parent=1 // loop_header
      %s15 = sphi 0, %s19
      %p16 = scmp.ge.s32.totalorder %s15, 10
      %s22 = sphi 0, %s41
      %s23 = sphi 0, %s37
      %s24 = sphi 0, %s33
      %s25 = sphi 0, %s22
      %s26 = sphi 0, %s23
      %s27 = sphi 0, %s24
      %s28 = sphi 0, %s25
      %s29 = sphi 0, %s26
      %s30 = sphi 0, %s27
      %s44 = sphi 0, %s46
      %s47 = sphi 0, %s44
      %s48 = sphi 0, %s47
      %s64 = sphi 0, %s48
      %s72 = sphi 0, %s74
      %s75 = sphi 0, %s72
      %s76 = sphi 0, %s75
      %s92 = sphi 0, %s76
      %s98 = sphi 0, %s100
      %s101 = sphi 0, %s98
      %s102 = sphi 0, %s101
      %s118 = sphi 0, %s102
      %s124 = sphi 0, %s126
      %s127 = sphi 0, %s124
      %s128 = sphi 0, %s127
      %s144 = sphi 0, %s128
      %s150 = sphi 0, %s152
      %s153 = sphi 0, %s150
      %s154 = sphi 0, %s153
      %s170 = sphi 0, %s154
      %s176 = sphi 0, %s178
      %s179 = sphi 0, %s176
      %s180 = sphi 0, %s179
      %s196 = sphi 0, %s180
      %s204 = sphi 0, %s206
      %s207 = sphi 0, %s204
      %s208 = sphi 0, %s207
      %s224 = sphi 0, %s208
    $region4: #{tpu_custom_call.1} parent=1 // loop_header_branch
      %18 = sbr.rel (%p16) target = $region8
    $region5: #{tpu_custom_call.1} parent=1 // loop_body
      %s20 = ssub.s32 %s15, 1
      %s21 = ssub.s32 %s15, 2
      %s31 = sadd.s32 1, %s24
      %p32 = scmp.ge.s32.totalorder %s31, 4
      %s33 = scalar_select %p32, 0, %s31
      %s34 = sadd.s32 1, %s23
      %s35 = scalar_select %p32, %s34, %s23
      %p36 = scmp.ge.s32.totalorder %s35, 1
      %s37 = scalar_select %p36, 0, %s35
      %s38 = sadd.s32 1, %s22
      %s39 = scalar_select %p36, %s38, %s22
      %p40 = scmp.ge.s32.totalorder %s39, 2
      %s41 = scalar_select %p40, 0, %s39
      %s42 = ssub.s32 %s22, %s41
      %p43 = scmp.eq.s32.totalorder %s42, 0
      %s45 = sadd.s32 %s44, 1
      %s46 = scalar_select %p43, %s44, %s45
      %p49 = pneg %p43
      %p50 = scmp.eq.s32.totalorder %s15, 7
      %p51 = por %p49, %p50
      %p52 = scmp.ne.s32.totalorder %s44, %s47
      %p53 = scmp.eq.s32.totalorder %s15, 0
      %p54 = por %p52, %p53
      %p55 = scmp.ne.s32.totalorder %s44, %s47
      %p56 = scmp.eq.s32.totalorder %s20, 7
      %p57 = por %p55, %p56
      %p58 = scmp.ne.s32.totalorder %s47, %s48
      %p59 = scmp.eq.s32.totalorder %s20, 0
      %p60 = por %p58, %p59
      %p61 = scmp.ne.s32.totalorder %s47, %s48
      %p62 = scmp.eq.s32.totalorder %s21, 7
      %p63 = por %p61, %p62
      %p65 = scmp.ne.s32.totalorder %s48, %s64
      %p66 = scmp.eq.s32.totalorder %s21, 0
      %p67 = por %p65, %p66
      %s68 = ssub.s32 %s22, %s41
      %s69 = ssub.s32 %s23, %s37
      %s70 = sor.u32 %s68, %s69
      %p71 = scmp.eq.s32.totalorder %s70, 0
      %s73 = sadd.s32 %s72, 1
      %s74 = scalar_select %p71, %s72, %s73
      %p77 = pneg %p71
      %p78 = scmp.eq.s32.totalorder %s15, 7
      %p79 = por %p77, %p78
      %p80 = scmp.ne.s32.totalorder %s72, %s75
      %p81 = scmp.eq.s32.totalorder %s15, 0
      %p82 = por %p80, %p81
      %p83 = scmp.ne.s32.totalorder %s72, %s75
      %p84 = scmp.eq.s32.totalorder %s20, 7
      %p85 = por %p83, %p84
      %p86 = scmp.ne.s32.totalorder %s75, %s76
      %p87 = scmp.eq.s32.totalorder %s20, 0
      %p88 = por %p86, %p87
      %p89 = scmp.ne.s32.totalorder %s75, %s76
      %p90 = scmp.eq.s32.totalorder %s21, 7
      %p91 = por %p89, %p90
      %p93 = scmp.ne.s32.totalorder %s76, %s92
      %p94 = scmp.eq.s32.totalorder %s21, 0
      %p95 = por %p93, %p94
      %s96 = ssub.s32 %s24, %s33
      %p97 = scmp.eq.s32.totalorder %s96, 0
      %s99 = sadd.s32 %s98, 1
      %s100 = scalar_select %p97, %s98, %s99
      %p103 = pneg %p97
      %p104 = scmp.eq.s32.totalorder %s15, 7
      %p105 = por %p103, %p104
      %p106 = scmp.ne.s32.totalorder %s98, %s101
      %p107 = scmp.eq.s32.totalorder %s15, 0
      %p108 = por %p106, %p107
      %p109 = scmp.ne.s32.totalorder %s98, %s101
      %p110 = scmp.eq.s32.totalorder %s20, 7
      %p111 = por %p109, %p110
      %p112 = scmp.ne.s32.totalorder %s101, %s102
      %p113 = scmp.eq.s32.totalorder %s20, 0
      %p114 = por %p112, %p113
      %p115 = scmp.ne.s32.totalorder %s101, %s102
      %p116 = scmp.eq.s32.totalorder %s21, 7
      %p117 = por %p115, %p116
      %p119 = scmp.ne.s32.totalorder %s102, %s118
      %p120 = scmp.eq.s32.totalorder %s21, 0
      %p121 = por %p119, %p120
      %s122 = ssub.s32 %s24, %s33
      %p123 = scmp.eq.s32.totalorder %s122, 0
      %s125 = sadd.s32 %s124, 1
      %s126 = scalar_select %p123, %s124, %s125
      %p129 = pneg %p123
      %p130 = scmp.eq.s32.totalorder %s15, 7
      %p131 = por %p129, %p130
      %p132 = scmp.ne.s32.totalorder %s124, %s127
      %p133 = scmp.eq.s32.totalorder %s15, 0
      %p134 = por %p132, %p133
      %p135 = scmp.ne.s32.totalorder %s124, %s127
      %p136 = scmp.eq.s32.totalorder %s20, 7
      %p137 = por %p135, %p136
      %p138 = scmp.ne.s32.totalorder %s127, %s128
      %p139 = scmp.eq.s32.totalorder %s20, 0
      %p140 = por %p138, %p139
      %p141 = scmp.ne.s32.totalorder %s127, %s128
      %p142 = scmp.eq.s32.totalorder %s21, 7
      %p143 = por %p141, %p142
      %p145 = scmp.ne.s32.totalorder %s128, %s144
      %p146 = scmp.eq.s32.totalorder %s21, 0
      %p147 = por %p145, %p146
      %s148 = ssub.s32 %s24, %s33
      %p149 = scmp.eq.s32.totalorder %s148, 0
      %s151 = sadd.s32 %s150, 1
      %s152 = scalar_select %p149, %s150, %s151
      %p155 = pneg %p149
      %p156 = scmp.eq.s32.totalorder %s15, 7
      %p157 = por %p155, %p156
      %p158 = scmp.ne.s32.totalorder %s150, %s153
      %p159 = scmp.eq.s32.totalorder %s15, 0
      %p160 = por %p158, %p159
      %p161 = scmp.ne.s32.totalorder %s150, %s153
      %p162 = scmp.eq.s32.totalorder %s20, 7
      %p163 = por %p161, %p162
      %p164 = scmp.ne.s32.totalorder %s153, %s154
      %p165 = scmp.eq.s32.totalorder %s20, 0
      %p166 = por %p164, %p165
      %p167 = scmp.ne.s32.totalorder %s153, %s154
      %p168 = scmp.eq.s32.totalorder %s21, 7
      %p169 = por %p167, %p168
      %p171 = scmp.ne.s32.totalorder %s154, %s170
      %p172 = scmp.eq.s32.totalorder %s21, 0
      %p173 = por %p171, %p172
      %s174 = ssub.s32 %s24, %s33
      %p175 = scmp.eq.s32.totalorder %s174, 0
      %s177 = sadd.s32 %s176, 1
      %s178 = scalar_select %p175, %s176, %s177
      %p181 = pneg %p175
      %p182 = scmp.eq.s32.totalorder %s15, 7
      %p183 = por %p181, %p182
      %p184 = scmp.ne.s32.totalorder %s176, %s179
      %p185 = scmp.eq.s32.totalorder %s15, 0
      %p186 = por %p184, %p185
      %p187 = scmp.ne.s32.totalorder %s176, %s179
      %p188 = scmp.eq.s32.totalorder %s20, 7
      %p189 = por %p187, %p188
      %p190 = scmp.ne.s32.totalorder %s179, %s180
      %p191 = scmp.eq.s32.totalorder %s20, 0
      %p192 = por %p190, %p191
      %p193 = scmp.ne.s32.totalorder %s179, %s180
      %p194 = scmp.eq.s32.totalorder %s21, 7
      %p195 = por %p193, %p194
      %p197 = scmp.ne.s32.totalorder %s180, %s196
      %p198 = scmp.eq.s32.totalorder %s21, 0
      %p199 = por %p197, %p198
      %s200 = ssub.s32 %s22, %s41
      %s201 = ssub.s32 %s23, %s37
      %s202 = sor.u32 %s200, %s201
      %p203 = scmp.eq.s32.totalorder %s202, 0
      %s205 = sadd.s32 %s204, 1
      %s206 = scalar_select %p203, %s204, %s205
      %p209 = pneg %p203
      %p210 = scmp.eq.s32.totalorder %s15, 7
      %p211 = por %p209, %p210
      %p212 = scmp.ne.s32.totalorder %s204, %s207
      %p213 = scmp.eq.s32.totalorder %s15, 0
      %p214 = por %p212, %p213
      %p215 = scmp.ne.s32.totalorder %s204, %s207
      %p216 = scmp.eq.s32.totalorder %s20, 7
      %p217 = por %p215, %p216
      %p218 = scmp.ne.s32.totalorder %s207, %s208
      %p219 = scmp.eq.s32.totalorder %s20, 0
      %p220 = por %p218, %p219
      %p221 = scmp.ne.s32.totalorder %s207, %s208
      %p222 = scmp.eq.s32.totalorder %s21, 7
      %p223 = por %p221, %p222
      %p225 = scmp.ne.s32.totalorder %s208, %s224
      %p226 = scmp.eq.s32.totalorder %s21, 0
      %p227 = por %p225, %p226
      %p228 = scmp.le.s32.totalorder 1, %s15
      %p229 = scmp.lt.s32.totalorder %s15, 9
      %p230 = pnand %p228, %p229
      %p231 = pneg %p230
      // Predicated region
      $region9: #{tpu_custom_call.1} parent=5 // pred_check
        _
      $region10: #{tpu_custom_call.1} parent=5 // pred_check_branch
        %233 = sbr.rel (%p230) target = $region12
      $region11: #{tpu_custom_call.1} parent=5 // pred_region
        %s234 = ssub.s32 %s15, 1
      $region12: #{tpu_custom_call.1} parent=5 // pred_fallthru
        _
      %p235 = scmp.lt.s32.totalorder %s15, 8
      // Predicated region
      $region13: #{tpu_custom_call.1} parent=5 // pred_check
        %p236 = pneg %p235
      $region14: #{tpu_custom_call.1} parent=5 // pred_check_branch
        %238 = sbr.rel (%p236) target = $region16
      $region15: #{tpu_custom_call.1} parent=5 // pred_region
        // Predicated region
        $region17: #{tpu_custom_call.1} parent=15 // pred_check
          %p239 = pneg %p54
        $region18: #{tpu_custom_call.1} parent=15 // pred_check_branch
          %241 = sbr.rel (%p239) target = $region20
        $region19: #{tpu_custom_call.1} parent=15 // pred_region
          %p242 = scmp.lt.s32.totalorder %s22, 1
          %s243 = scalar_select %p242, %s22, 1
          %s244 = smul.addr %s243, 8
          %s245 = scalar_lea.vmem %s0, %s244
        $region20: #{tpu_custom_call.1} parent=15 // pred_fallthru
          _
        // Predicated region
        $region21: #{tpu_custom_call.1} parent=15 // pred_check
          %p246 = pneg %p82
        $region22: #{tpu_custom_call.1} parent=15 // pred_check_branch
          %248 = sbr.rel (%p246) target = $region24
        $region23: #{tpu_custom_call.1} parent=15 // pred_region
          %p249 = scmp.lt.s32.totalorder %s22, 1
          %s250 = scalar_select %p249, %s22, 1
          %p251 = scmp.lt.s32.totalorder %s23, 0
          %s252 = scalar_select %p251, %s23, 0
          %s253 = sadd.s32 %s252, %s250
          %s254 = smul.addr %s253, 8
          %s255 = scalar_lea.vmem %s1, %s254
        $region24: #{tpu_custom_call.1} parent=15 // pred_fallthru
          _
        // Predicated region
        $region25: #{tpu_custom_call.1} parent=15 // pred_check
          %p256 = pneg %p108
        $region26: #{tpu_custom_call.1} parent=15 // pred_check_branch
          %258 = sbr.rel (%p256) target = $region28
        $region27: #{tpu_custom_call.1} parent=15 // pred_region
          %p259 = scmp.lt.s32.totalorder %s24, 3
          %s260 = scalar_select %p259, %s24, 3
          %s261 = smul.addr %s260, 4
          %s262 = smul.addr %s261, 8
          %s263 = scalar_lea.vmem %s2, %s262
        $region28: #{tpu_custom_call.1} parent=15 // pred_fallthru
          _
        // Predicated region
        $region29: #{tpu_custom_call.1} parent=15 // pred_check
          %p264 = pneg %p134
        $region30: #{tpu_custom_call.1} parent=15 // pred_check_branch
          %266 = sbr.rel (%p264) target = $region32
        $region31: #{tpu_custom_call.1} parent=15 // pred_region
          %p267 = scmp.lt.s32.totalorder %s24, 3
          %s268 = scalar_select %p267, %s24, 3
          %s269 = smul.addr %s268, 4
          %s270 = smul.addr %s269, 8
          %s271 = scalar_lea.vmem %s3, %s270
        $region32: #{tpu_custom_call.1} parent=15 // pred_fallthru
          _
        // Predicated region
        $region33: #{tpu_custom_call.1} parent=15 // pred_check
          %p272 = pneg %p160
        $region34: #{tpu_custom_call.1} parent=15 // pred_check_branch
          %274 = sbr.rel (%p272) target = $region36
        $region35: #{tpu_custom_call.1} parent=15 // pred_region
          %p275 = scmp.lt.s32.totalorder %s24, 3
          %s276 = scalar_select %p275, %s24, 3
          %s277 = smul.addr %s276, 4
          %s278 = smul.addr %s277, 8
          %s279 = scalar_lea.vmem %s4, %s278
        $region36: #{tpu_custom_call.1} parent=15 // pred_fallthru
          _
        // Predicated region
        $region37: #{tpu_custom_call.1} parent=15 // pred_check
          %p280 = pneg %p186
        $region38: #{tpu_custom_call.1} parent=15 // pred_check_branch
          %282 = sbr.rel (%p280) target = $region40
        $region39: #{tpu_custom_call.1} parent=15 // pred_region
          %p283 = scmp.lt.s32.totalorder %s24, 3
          %s284 = scalar_select %p283, %s24, 3
          %s285 = smul.addr %s284, 8
          %s286 = scalar_lea.vmem %s5, %s285
        $region40: #{tpu_custom_call.1} parent=15 // pred_fallthru
          _
      $region16: #{tpu_custom_call.1} parent=5 // pred_fallthru
        _
      %p287 = scmp.le.s32.totalorder 1, %s15
      %p288 = scmp.lt.s32.totalorder %s15, 9
      %p289 = pnand %p287, %p288
      %p290 = pneg %p289
      // Predicated region
      $region41: #{tpu_custom_call.1} parent=5 // pred_check
        _
      $region42: #{tpu_custom_call.1} parent=5 // pred_check_branch
        %292 = sbr.rel (%p289) target = $region44
      $region43: #{tpu_custom_call.1} parent=5 // pred_region
        %s293 = ssub.s32 %s15, 1
        %p294 = scmp.lt.s32.totalorder %s25, 1
        %s295 = scalar_select %p294, %s25, 1
        %s296 = smul.addr %s295, 8
        %s297 = scalar_lea.vmem %s0, %s296
        %p298 = pneg %p60
        %p299 = pneg %p57
        %p300 = scmp.lt.s32.totalorder %s25, 1
        %s301 = scalar_select %p300, %s25, 1
        %p302 = scmp.lt.s32.totalorder %s26, 0
        %s303 = scalar_select %p302, %s26, 0
        %s304 = sadd.s32 %s303, %s301
        %s305 = smul.addr %s304, 8
        %s306 = scalar_lea.vmem %s1, %s305
        %p307 = pneg %p88
        %p308 = pneg %p85
        %p309 = scmp.lt.s32.totalorder %s27, 3
        %s310 = scalar_select %p309, %s27, 3
        %s311 = smul.addr %s310, 4
        %s312 = smul.addr %s311, 8
        %s313 = scalar_lea.vmem %s2, %s312
        %p314 = pneg %p114
        %p315 = pneg %p111
        %p316 = scmp.lt.s32.totalorder %s27, 3
        %s317 = scalar_select %p316, %s27, 3
        %s318 = smul.addr %s317, 4
        %s319 = smul.addr %s318, 8
        %s320 = scalar_lea.vmem %s3, %s319
        %p321 = pneg %p140
        %p322 = pneg %p137
        %p323 = scmp.lt.s32.totalorder %s27, 3
        %s324 = scalar_select %p323, %s27, 3
        %s325 = smul.addr %s324, 4
        %s326 = smul.addr %s325, 8
        %s327 = scalar_lea.vmem %s4, %s326
        %p328 = pneg %p166
        %p329 = pneg %p163
        %p330 = scmp.lt.s32.totalorder %s27, 3
        %s331 = scalar_select %p330, %s27, 3
        %s332 = smul.addr %s331, 8
        %s333 = scalar_lea.vmem %s5, %s332
        %p334 = pneg %p192
        %p335 = pneg %p189
        %p336 = pneg %p220
        %p337 = pneg %p217
        %s338 = sand.u32 %s207, 1
        %s339 = scalar_lea.sflag [#allocation4], %s338
        %s340 = sand.u32 %s207, 1
        %s341 = smul.addr %s340, 8
        %s342 = scalar_lea.vmem [#allocation3], %s341
        %p343 = scmp.lt.s32.totalorder %s25, 1
        %s344 = scalar_select %p343, %s25, 1
        %s345 = smul.addr %s344, 8
        %s346 = scalar_lea.vmem %s0, %s345
        %p347 = scmp.lt.s32.totalorder %s25, 1
        %s348 = scalar_select %p347, %s25, 1
        %p349 = scmp.lt.s32.totalorder %s26, 0
        %s350 = scalar_select %p349, %s26, 0
        %s351 = sadd.s32 %s350, %s348
        %s352 = smul.addr %s351, 8
        %s353 = scalar_lea.vmem %s1, %s352
        %p354 = scmp.lt.s32.totalorder %s27, 3
        %s355 = scalar_select %p354, %s27, 3
        %s356 = smul.addr %s355, 4
        %s357 = smul.addr %s356, 8
        %s358 = scalar_lea.vmem %s2, %s357
        %p359 = scmp.lt.s32.totalorder %s27, 3
        %s360 = scalar_select %p359, %s27, 3
        %s361 = smul.addr %s360, 4
        %s362 = smul.addr %s361, 8
        %s363 = scalar_lea.vmem %s3, %s362
        %p364 = scmp.lt.s32.totalorder %s27, 3
        %s365 = scalar_select %p364, %s27, 3
        %s366 = smul.addr %s365, 4
        %s367 = smul.addr %s366, 8
        %s368 = scalar_lea.vmem %s4, %s367
        %p369 = scmp.lt.s32.totalorder %s27, 3
        %s370 = scalar_select %p369, %s27, 3
        %s371 = smul.addr %s370, 8
        %s372 = scalar_lea.vmem %s5, %s371
        %p373 = scmp.eq.s32.totalorder %s27, 0
        // Predicated region
        $region45: #{tpu_custom_call.1} parent=43 // pred_check
          %p374 = pneg %p373
        $region46: #{tpu_custom_call.1} parent=43 // pred_check_branch
          %376 = sbr.rel (%p374) target = $region48
        $region47: #{tpu_custom_call.1} parent=43 // pred_region
          %vm377 = vcmask 261120
          %378 = vst.msk [vmem:[#allocation2] sm:$0xff] %vm377, 0.0
        $region48: #{tpu_custom_call.1} parent=43 // pred_fallthru
          _
        %v379 = vld [vmem:[%s353] sm:$0xff]
        %v380 = vld [vmem:[%s346] sm:$0xff]
        %v381 = vld [vmem:[%s358] sm:$0xff]
        %v382 = vld [vmem:[%s358 + $0x8] sm:$0xff]
        %v383 = vld [vmem:[%s358 + $0x10] sm:$0xff]
        %v384 = vld [vmem:[%s358 + $0x18] sm:$0xff]
        %v385 = vld [vmem:[%s363] sm:$0xff]
        %v386 = vld [vmem:[%s363 + $0x8] sm:$0xff]
        %v387 = vld [vmem:[%s363 + $0x10] sm:$0xff]
        %v388 = vld [vmem:[%s363 + $0x18] sm:$0xff]
        %v389 = vld [vmem:[%s368] sm:$0xff]
        %v390 = vld [vmem:[%s368 + $0x8] sm:$0xff]
        %v391 = vld [vmem:[%s368 + $0x10] sm:$0xff]
        %v392 = vld [vmem:[%s368 + $0x18] sm:$0xff]
        %v393 = vld [vmem:[%s372] sm:$0xff]
        %vm394 = vcmask 261120
        %v396 = vsel %vm394, %v379, 0
        %398 = vmatprep.subr.mxu0 0.0
        %399 = vmatpush1.msra.mxu0 %v381
        %400 = vmatprep.subr.mxu0 0.0
        %401 = vmatpush1.msra.mxu0 %v382
        %402 = vmatprep.subr.mxu0 0.0
        %403 = vmatpush1.msra.mxu0 %v383
        %404 = vmatprep.subr.mxu0 0.0
        %405 = vmatpush1.msra.mxu0 %v384
        %406 = vmatprep.subr.mxu0 0.0
        %407 = vmatpush1.msra.mxu0 0.0
        %408 = vmatprep.subr.mxu0 0.0
        %409 = vmatpush1.msra.mxu0 0.0
        %410 = vmatprep.subr.mxu0 0.0
        %411 = vmatpush1.msra.mxu0 0.0
        %412 = vmatprep.subr.mxu0 0.0
        %413 = vmatpush1.msra.mxu0 0.0
        %414 = vmatprep.subr.mxu0 0.0
        %415 = vmatpush1.msra.mxu0 0.0
        %416 = vmatprep.subr.mxu0 0.0
        %417 = vmatpush1.msra.mxu0 0.0
        %418 = vmatprep.subr.mxu0 0.0
        %419 = vmatpush1.msra.mxu0 0.0
        %420 = vmatprep.subr.mxu0 0.0
        %421 = vmatpush1.msra.mxu0 0.0
        %422 = vmatprep.subr.mxu0 0.0
        %423 = vmatpush1.msra.mxu0 0.0
        %424 = vmatprep.subr.mxu0 0.0
        %425 = vmatpush1.msra.mxu0 0.0
        %426 = vmatprep.subr.mxu0 0.0
        %427 = vmatpush1.msra.mxu0 0.0
        %428 = vmatprep.subr.mxu0 0.0
        %429 = vmatpush1.msra.mxu0 0.0
        %430 = vmatprep.subr.mxu0 0.0
        %431 = vmatpush1.msra.mxu0 0.0
        %432 = vmatprep.subr.mxu0 0.0
        %433 = vmatpush1.msra.mxu0 0.0
        %434 = vmatprep.subr.mxu0 0.0
        %435 = vmatpush1.msra.mxu0 0.0
        %436 = vmatprep.subr.mxu0 0.0
        %437 = vmatpush1.msra.mxu0 0.0
        %438 = vmatprep.subr.mxu0 0.0
        %439 = vmatpush1.msra.mxu0 0.0
        %440 = vmatprep.subr.mxu0 0.0
        %441 = vmatpush1.msra.mxu0 0.0
        %442 = vmatprep.subr.mxu0 0.0
        %443 = vmatpush1.msra.mxu0 0.0
        %444 = vmatprep.subr.mxu0 0.0
        %445 = vmatpush1.msra.mxu0 0.0
        %446 = vmatprep.subr.mxu0 0.0
        %447 = vmatpush1.msra.mxu0 0.0
        %448 = vmatprep.subr.mxu0 0.0
        %449 = vmatpush1.msra.mxu0 0.0
        %450 = vmatprep.subr.mxu0 0.0
        %451 = vmatpush1.msra.mxu0 0.0
        %452 = vmatprep.subr.mxu0 0.0
        %453 = vmatpush1.msra.mxu0 0.0
        %454 = vmatprep.subr.mxu0 0.0
        %455 = vmatpush1.msra.mxu0 0.0
        %456 = vmatprep.subr.mxu0 0.0
        %457 = vmatpush1.msra.mxu0 0.0
        %458 = vmatprep.subr.mxu0 0.0
        %459 = vmatpush1.msra.mxu0 0.0
        %460 = vmatprep.subr.mxu0 0.0
        %461 = vmatpush1.msra.mxu0 0.0
        %462 = vmatprep.mubr.f32.mxu0 0.0
        %463 = vmatmul.mubr.f32.gmra.mrb[0].mxu0 %v396
        %v464 = vpop.f32.mrb[0].mxu0
        %v465 = vadd.f32 0.0, %v464
        %v466 = vpop.f32.mrb[0].mxu0
        %467 = vdwg.mxu0
        %v469 = vsel %vm394, %v380, 0
        %471 = vmatprep.subr.mxu0 0.0
        %472 = vmatpush1.msra.mxu0 %v385
        %473 = vmatprep.subr.mxu0 0.0
        %474 = vmatpush1.msra.mxu0 %v386
        %475 = vmatprep.subr.mxu0 0.0
        %476 = vmatpush1.msra.mxu0 %v387
        %477 = vmatprep.subr.mxu0 0.0
        %478 = vmatpush1.msra.mxu0 %v388
        %479 = vmatprep.subr.mxu0 0.0
        %480 = vmatpush1.msra.mxu0 0.0
        %481 = vmatprep.subr.mxu0 0.0
        %482 = vmatpush1.msra.mxu0 0.0
        %483 = vmatprep.subr.mxu0 0.0
        %484 = vmatpush1.msra.mxu0 0.0
        %485 = vmatprep.subr.mxu0 0.0
        %486 = vmatpush1.msra.mxu0 0.0
        %487 = vmatprep.subr.mxu0 0.0
        %488 = vmatpush1.msra.mxu0 0.0
        %489 = vmatprep.subr.mxu0 0.0
        %490 = vmatpush1.msra.mxu0 0.0
        %491 = vmatprep.subr.mxu0 0.0
        %492 = vmatpush1.msra.mxu0 0.0
        %493 = vmatprep.subr.mxu0 0.0
        %494 = vmatpush1.msra.mxu0 0.0
        %495 = vmatprep.subr.mxu0 0.0
        %496 = vmatpush1.msra.mxu0 0.0
        %497 = vmatprep.subr.mxu0 0.0
        %498 = vmatpush1.msra.mxu0 0.0
        %499 = vmatprep.subr.mxu0 0.0
        %500 = vmatpush1.msra.mxu0 0.0
        %501 = vmatprep.subr.mxu0 0.0
        %502 = vmatpush1.msra.mxu0 0.0
        %503 = vmatprep.subr.mxu0 0.0
        %504 = vmatpush1.msra.mxu0 0.0
        %505 = vmatprep.subr.mxu0 0.0
        %506 = vmatpush1.msra.mxu0 0.0
        %507 = vmatprep.subr.mxu0 0.0
        %508 = vmatpush1.msra.mxu0 0.0
        %509 = vmatprep.subr.mxu0 0.0
        %510 = vmatpush1.msra.mxu0 0.0
        %511 = vmatprep.subr.mxu0 0.0
        %512 = vmatpush1.msra.mxu0 0.0
        %513 = vmatprep.subr.mxu0 0.0
        %514 = vmatpush1.msra.mxu0 0.0
        %515 = vmatprep.subr.mxu0 0.0
        %516 = vmatpush1.msra.mxu0 0.0
        %517 = vmatprep.subr.mxu0 0.0
        %518 = vmatpush1.msra.mxu0 0.0
        %519 = vmatprep.subr.mxu0 0.0
        %520 = vmatpush1.msra.mxu0 0.0
        %521 = vmatprep.subr.mxu0 0.0
        %522 = vmatpush1.msra.mxu0 0.0
        %523 = vmatprep.subr.mxu0 0.0
        %524 = vmatpush1.msra.mxu0 0.0
        %525 = vmatprep.subr.mxu0 0.0
        %526 = vmatpush1.msra.mxu0 0.0
        %527 = vmatprep.subr.mxu0 0.0
        %528 = vmatpush1.msra.mxu0 0.0
        %529 = vmatprep.subr.mxu0 0.0
        %530 = vmatpush1.msra.mxu0 0.0
        %531 = vmatprep.subr.mxu0 0.0
        %532 = vmatpush1.msra.mxu0 0.0
        %533 = vmatprep.subr.mxu0 0.0
        %534 = vmatpush1.msra.mxu0 0.0
        %535 = vmatprep.mubr.f32.mxu0 0.0
        %536 = vmatmul.mubr.f32.gmra.mrb[0].mxu0 %v469
        %v537 = vpop.f32.mrb[0].mxu0
        %v538 = vadd.f32 0.0, %v537
        %v539 = vpop.f32.mrb[0].mxu0
        %540 = vdwg.mxu0
        %541 = vmatprep.subr.mxu0 0.0
        %542 = vmatpush1.msra.mxu0 %v389
        %543 = vmatprep.subr.mxu0 0.0
        %544 = vmatpush1.msra.mxu0 %v390
        %545 = vmatprep.subr.mxu0 0.0
        %546 = vmatpush1.msra.mxu0 %v391
        %547 = vmatprep.subr.mxu0 0.0
        %548 = vmatpush1.msra.mxu0 %v392
        %549 = vmatprep.subr.mxu0 0.0
        %550 = vmatpush1.msra.mxu0 0.0
        %551 = vmatprep.subr.mxu0 0.0
        %552 = vmatpush1.msra.mxu0 0.0
        %553 = vmatprep.subr.mxu0 0.0
        %554 = vmatpush1.msra.mxu0 0.0
        %555 = vmatprep.subr.mxu0 0.0
        %556 = vmatpush1.msra.mxu0 0.0
        %557 = vmatprep.subr.mxu0 0.0
        %558 = vmatpush1.msra.mxu0 0.0
        %559 = vmatprep.subr.mxu0 0.0
        %560 = vmatpush1.msra.mxu0 0.0
        %561 = vmatprep.subr.mxu0 0.0
        %562 = vmatpush1.msra.mxu0 0.0
        %563 = vmatprep.subr.mxu0 0.0
        %564 = vmatpush1.msra.mxu0 0.0
        %565 = vmatprep.subr.mxu0 0.0
        %566 = vmatpush1.msra.mxu0 0.0
        %567 = vmatprep.subr.mxu0 0.0
        %568 = vmatpush1.msra.mxu0 0.0
        %569 = vmatprep.subr.mxu0 0.0
        %570 = vmatpush1.msra.mxu0 0.0
        %571 = vmatprep.subr.mxu0 0.0
        %572 = vmatpush1.msra.mxu0 0.0
        %573 = vmatprep.subr.mxu0 0.0
        %574 = vmatpush1.msra.mxu0 0.0
        %575 = vmatprep.subr.mxu0 0.0
        %576 = vmatpush1.msra.mxu0 0.0
        %577 = vmatprep.subr.mxu0 0.0
        %578 = vmatpush1.msra.mxu0 0.0
        %579 = vmatprep.subr.mxu0 0.0
        %580 = vmatpush1.msra.mxu0 0.0
        %581 = vmatprep.subr.mxu0 0.0
        %582 = vmatpush1.msra.mxu0 0.0
        %583 = vmatprep.subr.mxu0 0.0
        %584 = vmatpush1.msra.mxu0 0.0
        %585 = vmatprep.subr.mxu0 0.0
        %586 = vmatpush1.msra.mxu0 0.0
        %587 = vmatprep.subr.mxu0 0.0
        %588 = vmatpush1.msra.mxu0 0.0
        %589 = vmatprep.subr.mxu0 0.0
        %590 = vmatpush1.msra.mxu0 0.0
        %591 = vmatprep.subr.mxu0 0.0
        %592 = vmatpush1.msra.mxu0 0.0
        %593 = vmatprep.subr.mxu0 0.0
        %594 = vmatpush1.msra.mxu0 0.0
        %595 = vmatprep.subr.mxu0 0.0
        %596 = vmatpush1.msra.mxu0 0.0
        %597 = vmatprep.subr.mxu0 0.0
        %598 = vmatpush1.msra.mxu0 0.0
        %599 = vmatprep.subr.mxu0 0.0
        %600 = vmatpush1.msra.mxu0 0.0
        %601 = vmatprep.subr.mxu0 0.0
        %602 = vmatpush1.msra.mxu0 0.0
        %603 = vmatprep.subr.mxu0 0.0
        %604 = vmatpush1.msra.mxu0 0.0
        %605 = vmatprep.mubr.f32.mxu0 0.0
        %606 = vmatmul.mubr.f32.gmra.mrb[0].mxu0 %v469
        %v607 = vpop.f32.mrb[0].mxu0
        %v608 = vadd.f32 0.0, %v607
        %v609 = vpop.f32.mrb[0].mxu0
        %610 = vdwg.mxu0
        %vm611 = vcmask 64512
        %v613 = vsel %vm611, %v465, 0
        %v616 = vsel %vm611, %v538, 0
        %618 = vmatprep.subr.mxu0 0.0
        %619 = vmatpush1.xpose.msra.mxu0 %v616
        %620 = vmatprep.subr.mxu0 0.0
        %621 = vmatpush1.xpose.msra.mxu0 0.0
        %622 = vmatprep.subr.mxu0 0.0
        %623 = vmatpush1.xpose.msra.mxu0 0.0
        %624 = vmatprep.subr.mxu0 0.0
        %625 = vmatpush1.xpose.msra.mxu0 0.0
        %626 = vmatprep.subr.mxu0 0.0
        %627 = vmatpush1.xpose.msra.mxu0 0.0
        %628 = vmatprep.subr.mxu0 0.0
        %629 = vmatpush1.xpose.msra.mxu0 0.0
        %630 = vmatprep.subr.mxu0 0.0
        %631 = vmatpush1.xpose.msra.mxu0 0.0
        %632 = vmatprep.subr.mxu0 0.0
        %633 = vmatpush1.xpose.msra.mxu0 0.0
        %634 = vmatprep.subr.mxu0 0.0
        %635 = vmatpush1.xpose.msra.mxu0 0.0
        %636 = vmatprep.subr.mxu0 0.0
        %637 = vmatpush1.xpose.msra.mxu0 0.0
        %638 = vmatprep.subr.mxu0 0.0
        %639 = vmatpush1.xpose.msra.mxu0 0.0
        %640 = vmatprep.subr.mxu0 0.0
        %641 = vmatpush1.xpose.msra.mxu0 0.0
        %642 = vmatprep.subr.mxu0 0.0
        %643 = vmatpush1.xpose.msra.mxu0 0.0
        %644 = vmatprep.subr.mxu0 0.0
        %645 = vmatpush1.xpose.msra.mxu0 0.0
        %646 = vmatprep.subr.mxu0 0.0
        %647 = vmatpush1.xpose.msra.mxu0 0.0
        %648 = vmatprep.subr.mxu0 0.0
        %649 = vmatpush1.xpose.msra.mxu0 0.0
        %650 = vmatprep.subr.mxu0 0.0
        %651 = vmatpush1.xpose.msra.mxu0 0.0
        %652 = vmatprep.subr.mxu0 0.0
        %653 = vmatpush1.xpose.msra.mxu0 0.0
        %654 = vmatprep.subr.mxu0 0.0
        %655 = vmatpush1.xpose.msra.mxu0 0.0
        %656 = vmatprep.subr.mxu0 0.0
        %657 = vmatpush1.xpose.msra.mxu0 0.0
        %658 = vmatprep.subr.mxu0 0.0
        %659 = vmatpush1.xpose.msra.mxu0 0.0
        %660 = vmatprep.subr.mxu0 0.0
        %661 = vmatpush1.xpose.msra.mxu0 0.0
        %662 = vmatprep.subr.mxu0 0.0
        %663 = vmatpush1.xpose.msra.mxu0 0.0
        %664 = vmatprep.subr.mxu0 0.0
        %665 = vmatpush1.xpose.msra.mxu0 0.0
        %666 = vmatprep.subr.mxu0 0.0
        %667 = vmatpush1.xpose.msra.mxu0 0.0
        %668 = vmatprep.subr.mxu0 0.0
        %669 = vmatpush1.xpose.msra.mxu0 0.0
        %670 = vmatprep.subr.mxu0 0.0
        %671 = vmatpush1.xpose.msra.mxu0 0.0
        %672 = vmatprep.subr.mxu0 0.0
        %673 = vmatpush1.xpose.msra.mxu0 0.0
        %674 = vmatprep.subr.mxu0 0.0
        %675 = vmatpush1.xpose.msra.mxu0 0.0
        %676 = vmatprep.subr.mxu0 0.0
        %677 = vmatpush1.xpose.msra.mxu0 0.0
        %678 = vmatprep.subr.mxu0 0.0
        %679 = vmatpush1.xpose.msra.mxu0 0.0
        %680 = vmatprep.subr.mxu0 0.0
        %681 = vmatpush1.xpose.msra.mxu0 0.0
        %682 = vmatprep.mubr.f32.mxu0 0.0
        %683 = vmatmul.mubr.f32.gmra.mrb[0].mxu0 %v613
        %v684 = vpop.f32.mrb[0].mxu0
        %v685 = vadd.f32 0.0, %v684
        %v686 = vpop.f32.mrb[0].mxu0
        %687 = vdwg.mxu0
        %v688 = vmul.f32 %v685, 0.35355338
        %v689 = vsel %vm611, %v688, -inf
        %690 = vmax.xlane.f32.xlu0 %v689
        %v691 = vpop.xlane.xlu0 %690
        %v692 = vsub.f32 %v688, %v691
        %v693 = vmul.f32 %v692, 1.442695
        %v694 = vpow.pop %v693
        %v695 = vsel %vm611, %v694, 0.0
        %696 = vadd.xlane.f32.xlu0 %v695
        %v697 = vpop.xlane.xlu0 %696
        %v698 = vrcp.pop %v697
        %v699 = vmul.f32 %v694, %v698
        %v701 = vsel %vm611, %v699, 0
        %703 = vmatprep.subr.mxu0 0.0
        %704 = vmatpush1.msra.mxu0 %v608
        %705 = vmatprep.subr.mxu0 0.0
        %706 = vmatpush1.msra.mxu0 0.0
        %707 = vmatprep.subr.mxu0 0.0
        %708 = vmatpush1.msra.mxu0 0.0
        %709 = vmatprep.subr.mxu0 0.0
        %710 = vmatpush1.msra.mxu0 0.0
        %711 = vmatprep.subr.mxu0 0.0
        %712 = vmatpush1.msra.mxu0 0.0
        %713 = vmatprep.subr.mxu0 0.0
        %714 = vmatpush1.msra.mxu0 0.0
        %715 = vmatprep.subr.mxu0 0.0
        %716 = vmatpush1.msra.mxu0 0.0
        %717 = vmatprep.subr.mxu0 0.0
        %718 = vmatpush1.msra.mxu0 0.0
        %719 = vmatprep.subr.mxu0 0.0
        %720 = vmatpush1.msra.mxu0 0.0
        %721 = vmatprep.subr.mxu0 0.0
        %722 = vmatpush1.msra.mxu0 0.0
        %723 = vmatprep.subr.mxu0 0.0
        %724 = vmatpush1.msra.mxu0 0.0
        %725 = vmatprep.subr.mxu0 0.0
        %726 = vmatpush1.msra.mxu0 0.0
        %727 = vmatprep.subr.mxu0 0.0
        %728 = vmatpush1.msra.mxu0 0.0
        %729 = vmatprep.subr.mxu0 0.0
        %730 = vmatpush1.msra.mxu0 0.0
        %731 = vmatprep.subr.mxu0 0.0
        %732 = vmatpush1.msra.mxu0 0.0
        %733 = vmatprep.subr.mxu0 0.0
        %734 = vmatpush1.msra.mxu0 0.0
        %735 = vmatprep.subr.mxu0 0.0
        %736 = vmatpush1.msra.mxu0 0.0
        %737 = vmatprep.subr.mxu0 0.0
        %738 = vmatpush1.msra.mxu0 0.0
        %739 = vmatprep.subr.mxu0 0.0
        %740 = vmatpush1.msra.mxu0 0.0
        %741 = vmatprep.subr.mxu0 0.0
        %742 = vmatpush1.msra.mxu0 0.0
        %743 = vmatprep.subr.mxu0 0.0
        %744 = vmatpush1.msra.mxu0 0.0
        %745 = vmatprep.subr.mxu0 0.0
        %746 = vmatpush1.msra.mxu0 0.0
        %747 = vmatprep.subr.mxu0 0.0
        %748 = vmatpush1.msra.mxu0 0.0
        %749 = vmatprep.subr.mxu0 0.0
        %750 = vmatpush1.msra.mxu0 0.0
        %751 = vmatprep.subr.mxu0 0.0
        %752 = vmatpush1.msra.mxu0 0.0
        %753 = vmatprep.subr.mxu0 0.0
        %754 = vmatpush1.msra.mxu0 0.0
        %755 = vmatprep.subr.mxu0 0.0
        %756 = vmatpush1.msra.mxu0 0.0
        %757 = vmatprep.subr.mxu0 0.0
        %758 = vmatpush1.msra.mxu0 0.0
        %759 = vmatprep.subr.mxu0 0.0
        %760 = vmatpush1.msra.mxu0 0.0
        %761 = vmatprep.subr.mxu0 0.0
        %762 = vmatpush1.msra.mxu0 0.0
        %763 = vmatprep.subr.mxu0 0.0
        %764 = vmatpush1.msra.mxu0 0.0
        %765 = vmatprep.subr.mxu0 0.0
        %766 = vmatpush1.msra.mxu0 0.0
        %767 = vmatprep.mubr.f32.mxu0 0.0
        %768 = vmatmul.mubr.f32.gmra.mrb[0].mxu0 %v701
        %v769 = vpop.f32.mrb[0].mxu0
        %v770 = vadd.f32 0.0, %v769
        %v771 = vpop.f32.mrb[0].mxu0
        %772 = vdwg.mxu0
        %v773 = vld [vmem:[#allocation2] sm:$0xff]
        %v775 = vsel %vm611, %v770, 0
        %777 = vmatprep.subr.mxu0 0.0
        %778 = vmatpush1.msra.mxu0 %v393
        %779 = vmatprep.subr.mxu0 0.0
        %780 = vmatpush1.msra.mxu0 0.0
        %781 = vmatprep.subr.mxu0 0.0
        %782 = vmatpush1.msra.mxu0 0.0
        %783 = vmatprep.subr.mxu0 0.0
        %784 = vmatpush1.msra.mxu0 0.0
        %785 = vmatprep.subr.mxu0 0.0
        %786 = vmatpush1.msra.mxu0 0.0
        %787 = vmatprep.subr.mxu0 0.0
        %788 = vmatpush1.msra.mxu0 0.0
        %789 = vmatprep.subr.mxu0 0.0
        %790 = vmatpush1.msra.mxu0 0.0
        %791 = vmatprep.subr.mxu0 0.0
        %792 = vmatpush1.msra.mxu0 0.0
        %793 = vmatprep.subr.mxu0 0.0
        %794 = vmatpush1.msra.mxu0 0.0
        %795 = vmatprep.subr.mxu0 0.0
        %796 = vmatpush1.msra.mxu0 0.0
        %797 = vmatprep.subr.mxu0 0.0
        %798 = vmatpush1.msra.mxu0 0.0
        %799 = vmatprep.subr.mxu0 0.0
        %800 = vmatpush1.msra.mxu0 0.0
        %801 = vmatprep.subr.mxu0 0.0
        %802 = vmatpush1.msra.mxu0 0.0
        %803 = vmatprep.subr.mxu0 0.0
        %804 = vmatpush1.msra.mxu0 0.0
        %805 = vmatprep.subr.mxu0 0.0
        %806 = vmatpush1.msra.mxu0 0.0
        %807 = vmatprep.subr.mxu0 0.0
        %808 = vmatpush1.msra.mxu0 0.0
        %809 = vmatprep.subr.mxu0 0.0
        %810 = vmatpush1.msra.mxu0 0.0
        %811 = vmatprep.subr.mxu0 0.0
        %812 = vmatpush1.msra.mxu0 0.0
        %813 = vmatprep.subr.mxu0 0.0
        %814 = vmatpush1.msra.mxu0 0.0
        %815 = vmatprep.subr.mxu0 0.0
        %816 = vmatpush1.msra.mxu0 0.0
        %817 = vmatprep.subr.mxu0 0.0
        %818 = vmatpush1.msra.mxu0 0.0
        %819 = vmatprep.subr.mxu0 0.0
        %820 = vmatpush1.msra.mxu0 0.0
        %821 = vmatprep.subr.mxu0 0.0
        %822 = vmatpush1.msra.mxu0 0.0
        %823 = vmatprep.subr.mxu0 0.0
        %824 = vmatpush1.msra.mxu0 0.0
        %825 = vmatprep.subr.mxu0 0.0
        %826 = vmatpush1.msra.mxu0 0.0
        %827 = vmatprep.subr.mxu0 0.0
        %828 = vmatpush1.msra.mxu0 0.0
        %829 = vmatprep.subr.mxu0 0.0
        %830 = vmatpush1.msra.mxu0 0.0
        %831 = vmatprep.subr.mxu0 0.0
        %832 = vmatpush1.msra.mxu0 0.0
        %833 = vmatprep.subr.mxu0 0.0
        %834 = vmatpush1.msra.mxu0 0.0
        %835 = vmatprep.subr.mxu0 0.0
        %836 = vmatpush1.msra.mxu0 0.0
        %837 = vmatprep.subr.mxu0 0.0
        %838 = vmatpush1.msra.mxu0 0.0
        %839 = vmatprep.subr.mxu0 0.0
        %840 = vmatpush1.msra.mxu0 0.0
        %841 = vmatprep.mubr.f32.mxu0 0.0
        %842 = vmatmul.mubr.f32.gmra.mrb[0].mxu0 %v775
        %v843 = vpop.f32.mrb[0].mxu0
        %v844 = vadd.f32 0.0, %v843
        %v845 = vpop.f32.mrb[0].mxu0
        %846 = vdwg.mxu0
        %v847 = vadd.f32 %v773, %v844
        %848 = vst.msk [vmem:[#allocation2] sm:$0xff] %vm394, %v847
        %p849 = scmp.eq.s32.totalorder %s27, 3
        // Predicated region
        $region49: #{tpu_custom_call.1} parent=43 // pred_check
          %p850 = pneg %p849
        $region50: #{tpu_custom_call.1} parent=43 // pred_check_branch
          %852 = sbr.rel (%p850) target = $region52
        $region51: #{tpu_custom_call.1} parent=43 // pred_region
          %v853 = vld [vmem:[#allocation2] sm:$0xff]
          %854 = vst.msk [vmem:[%s342] sm:$0xff] %vm394, %v853
        $region52: #{tpu_custom_call.1} parent=43 // pred_fallthru
          _
        %s855 = sand.u32 %s207, 1
        %s856 = scalar_lea.sflag [#allocation4], %s855
        %s857 = sand.u32 %s207, 1
        %s858 = smul.addr %s857, 8
        %s859 = scalar_lea.vmem [#allocation3], %s858
        // Predicated region
        $region53: #{tpu_custom_call.1} parent=43 // pred_check
          %p860 = pneg %p217
        $region54: #{tpu_custom_call.1} parent=43 // pred_check_branch
          %862 = sbr.rel (%p860) target = $region56
        $region55: #{tpu_custom_call.1} parent=43 // pred_region
          %s864 = ssub.s32 128, 128
          %865 = vsyncadd %s856, %s864
          %s866 = sadd.s32 %s26, %s25
          %s867 = smul.addr %s866, 128
          %s868 = scalar_lea.hbm %s6, %s867
          %s870 = sshll.u32 %s859, 4
          %s871 = int_to_ptr.vmem [resolvable:$true] %s870
          %873 = dma.vmem_to_hbm [thread:$0]  %s871, 128, %s868, %s856
        $region56: #{tpu_custom_call.1} parent=43 // pred_fallthru
          _
      $region44: #{tpu_custom_call.1} parent=5 // pred_fallthru
        _
      %p874 = scmp.le.s32.totalorder 2, %s15
      // Predicated region
      $region57: #{tpu_custom_call.1} parent=5 // pred_check
        %p875 = pneg %p874
      $region58: #{tpu_custom_call.1} parent=5 // pred_check_branch
        %877 = sbr.rel (%p875) target = $region60
      $region59: #{tpu_custom_call.1} parent=5 // pred_region
        %s878 = ssub.s32 %s15, 2
        // Predicated region
        $region61: #{tpu_custom_call.1} parent=59 // pred_check
          %p879 = pneg %p223
        $region62: #{tpu_custom_call.1} parent=59 // pred_check_branch
          %881 = sbr.rel (%p879) target = $region64
        $region63: #{tpu_custom_call.1} parent=59 // pred_region
          %s882 = sand.u32 %s208, 1
          %s883 = scalar_lea.sflag [#allocation4], %s882
          %s884 = sand.u32 %s208, 1
          %s885 = smul.addr %s884, 8
          %s886 = scalar_lea.vmem [#allocation3], %s885
          %887 = dma.done %s883, 128
        $region64: #{tpu_custom_call.1} parent=59 // pred_fallthru
          _
      $region60: #{tpu_custom_call.1} parent=5 // pred_fallthru
        _
    $region6: #{tpu_custom_call.1} parent=1 // loop_footer
      %s19 = sadd.s32 1, %s15
    $region7: #{tpu_custom_call.1} parent=1 // loop_footer_branch
      %14 = sbr.rel target = $region3
    $region8: #{tpu_custom_call.1} parent=1 // loop_exit
      _
    %888 = vsyncpa [#allocation4], 1
    %s889 = scalar_lea.sflag [#allocation4], 1
    %890 = vsyncpa %s889, 1

</llo_original>
